<compile_context>
chip_gen: v6e
topology: v6e:2x2x1
jax: 0.10.0
libtpu: 0.0.40
codegen_flags: <defaults>
</compile_context>

<pallas_src>
import functools

import jax
import jax.numpy as jnp
from jax.experimental import pallas as pl
from jax.experimental.pallas import tpu as pltpu


def _concat_dma_kernel(x_hbm, y_hbm, o_hbm, sem, *,
                       cx_flat, cy_flat, chunk_starts, chunk_sizes):
    """Single-step kernel: issue all HBM->HBM copies, then drain them.

    x_hbm: (N, Cx*H*W) in HBM
    y_hbm: (N, Cy*H*W) in HBM
    o_hbm: (N, (Cx+Cy)*H*W) in HBM
    sem:   DMA semaphores, shape (2, n_chunks)
    """
    copies = []
    # Static Python loop over a small, fixed number of chunks (<= 4).
    for c, (row0, rows) in enumerate(zip(chunk_starts, chunk_sizes)):
        cp_x = pltpu.make_async_copy(
            x_hbm.at[pl.ds(row0, rows), :],
            o_hbm.at[pl.ds(row0, rows), pl.ds(0, cx_flat)],
            sem.at[0, c])
        cp_y = pltpu.make_async_copy(
            y_hbm.at[pl.ds(row0, rows), :],
            o_hbm.at[pl.ds(row0, rows), pl.ds(cx_flat, cy_flat)],
            sem.at[1, c])
        # Start everything first so all descriptors are concurrently in flight.
        cp_x.start()
        cp_y.start()
        copies.append(cp_x)
        copies.append(cp_y)
    # Drain all outstanding DMAs before the kernel exits.
    for cp in copies:
        cp.wait()


def concat_channels(x, y, *, max_dma_chunks=4):
    """torch.cat((x, y), dim=1) for NCHW tensors, as a Pallas TPU kernel."""
    assert x.ndim == 4 and y.ndim == 4, "expected NCHW inputs"
    N, Cx, H, W = x.shape
    Ny, Cy, Hy, Wy = y.shape
    assert (N, H, W) == (Ny, Hy, Wy), "non-channel dims must match for concat(dim=1)"
    assert x.dtype == y.dtype
    Co = Cx + Cy

    # Flatten C*H*W: free for row-major NCHW, and makes each per-row copy a
    # contiguous inner run for both source and destination halves.
    cx_flat = Cx * H * W
    cy_flat = Cy * H * W
    co_flat = Co * H * W
    x2 = x.reshape(N, cx_flat)
    y2 = y.reshape(N, cy_flat)

    # Split the batch dimension into a few large chunks so several DMA
    # descriptors are in flight at once (hides per-DMA latency).
    n_chunks = max(1, min(int(max_dma_chunks), N))
    base, rem = divmod(N, n_chunks)
    chunk_sizes = tuple(base + (1 if i < rem else 0) for i in range(n_chunks))
    chunk_starts = tuple(int(sum(chunk_sizes[:i])) for i in range(n_chunks))

    itemsize = jnp.dtype(x.dtype).itemsize
    total_bytes = N * co_flat * itemsize  # bytes written == bytes read

    kernel = functools.partial(
        _concat_dma_kernel,
        cx_flat=cx_flat, cy_flat=cy_flat,
        chunk_starts=chunk_starts, chunk_sizes=chunk_sizes)

    out2 = pl.pallas_call(
        kernel,
        out_shape=jax.ShapeDtypeStruct((N, co_flat), x.dtype),
        grid_spec=pltpu.PrefetchScalarGridSpec(
            num_scalar_prefetch=0,
            grid=(1,),  # single grid step: no per-row grid-step overhead
            in_specs=[
                pl.BlockSpec(memory_space=pl.ANY),  # x stays in HBM, no auto-DMA
                pl.BlockSpec(memory_space=pl.ANY),  # y stays in HBM, no auto-DMA
            ],
            out_specs=pl.BlockSpec(memory_space=pl.ANY),  # out written via DMA
            scratch_shapes=[pltpu.SemaphoreType.DMA((2, n_chunks))],
        ),
        compiler_params=pltpu.CompilerParams(
            dimension_semantics=("arbitrary",),
        ),
        cost_estimate=pl.CostEstimate(
            flops=0, transcendentals=0, bytes_accessed=2 * total_bytes),
    )(x2, y2)

    return out2.reshape(N, Co, H, W)


if __name__ == "__main__":
    key = jax.random.PRNGKey(0)
    kx, ky = jax.random.split(key)

    # Small shapes consistent with an NCHW feature-map concat.
    N, Cx, Cy, H, W = 2, 4, 6, 16, 16
    x = jax.random.normal(kx, (N, Cx, H, W), dtype=jnp.float32)
    y = jax.random.normal(ky, (N, Cy, H, W), dtype=jnp.float32)

    out = concat_channels(x, y)
    out = jax.block_until_ready(out)

    # Verify against the plain-JAX reference of torch.cat((x, y), dim=1).
    ref = jnp.concatenate((x, y), axis=1)
    assert out.shape == (N, Cx + Cy, H, W)
    assert out.dtype == x.dtype
    assert jnp.array_equal(out, ref)

    print("KERNEL_OK")
</pallas_src>

<mosaic_0001>
module attributes {stable_mosaic.version = 11 : i64} {
  func.func @_concat_dma_kernel(%arg0: i32, %arg1: memref<2x1024xf32, #tpu.memory_space<any>>, %arg2: memref<2x1536xf32, #tpu.memory_space<any>>, %arg3: memref<2x2560xf32, #tpu.memory_space<any>>, %arg4: memref<2x2x!tpu.dma_semaphore, #tpu.memory_space<semaphore_mem>>) attributes {dimension_semantics = [#tpu.dimension_semantics<arbitrary>], iteration_bounds = array<i64: 1>, scalar_prefetch = 0 : i64, scratch_operands = 1 : i64, tpu.core_type = #tpu.core_type<tc>, window_params = [{}, {}, {}]} {
    %c0_i32 = arith.constant 0 : i32
    %c0_i32_0 = arith.constant 0 : i32
    %c0_i32_1 = arith.constant 0 : i32
    %c0_i32_2 = arith.constant 0 : i32
    %0 = tpu.memref_slice %arg1[%c0_i32_1, %c0_i32_2] : memref<2x1024xf32, #tpu.memory_space<any>> -> memref<1x1024xf32, #tpu.memory_space<any>>
    %c0_i32_3 = arith.constant 0 : i32
    %c0_i32_4 = arith.constant 0 : i32
    %1 = tpu.memref_slice %arg3[%c0_i32_3, %c0_i32_4] : memref<2x2560xf32, #tpu.memory_space<any>> -> memref<1x1024xf32, #tpu.memory_space<any>>
    %2 = tpu.memref_slice %arg4[%c0_i32, %c0_i32_0] : memref<2x2x!tpu.dma_semaphore, #tpu.memory_space<semaphore_mem>> -> memref<1x1x!tpu.dma_semaphore, #tpu.memory_space<semaphore_mem>>
    %3 = tpu.memref_squeeze %2 : memref<1x1x!tpu.dma_semaphore, #tpu.memory_space<semaphore_mem>> -> memref<!tpu.dma_semaphore, #tpu.memory_space<semaphore_mem>>
    tpu.enqueue_dma source(%0 : memref<1x1024xf32, #tpu.memory_space<any>>) target(%1 : memref<1x1024xf32, #tpu.memory_space<any>>) target_semaphore(%3 : memref<!tpu.dma_semaphore, #tpu.memory_space<semaphore_mem>>)
    %c1_i32 = arith.constant 1 : i32
    %c0_i32_5 = arith.constant 0 : i32
    %c0_i32_6 = arith.constant 0 : i32
    %c0_i32_7 = arith.constant 0 : i32
    %4 = tpu.memref_slice %arg2[%c0_i32_6, %c0_i32_7] : memref<2x1536xf32, #tpu.memory_space<any>> -> memref<1x1536xf32, #tpu.memory_space<any>>
    %c0_i32_8 = arith.constant 0 : i32
    %c1024_i32 = arith.constant 1024 : i32
    %5 = tpu.memref_slice %arg3[%c0_i32_8, %c1024_i32] : memref<2x2560xf32, #tpu.memory_space<any>> -> memref<1x1536xf32, #tpu.memory_space<any>>
    %6 = tpu.memref_slice %arg4[%c1_i32, %c0_i32_5] : memref<2x2x!tpu.dma_semaphore, #tpu.memory_space<semaphore_mem>> -> memref<1x1x!tpu.dma_semaphore, #tpu.memory_space<semaphore_mem>>
    %7 = tpu.memref_squeeze %6 : memref<1x1x!tpu.dma_semaphore, #tpu.memory_space<semaphore_mem>> -> memref<!tpu.dma_semaphore, #tpu.memory_space<semaphore_mem>>
    tpu.enqueue_dma source(%4 : memref<1x1536xf32, #tpu.memory_space<any>>) target(%5 : memref<1x1536xf32, #tpu.memory_space<any>>) target_semaphore(%7 : memref<!tpu.dma_semaphore, #tpu.memory_space<semaphore_mem>>)
    %c0_i32_9 = arith.constant 0 : i32
    %c1_i32_10 = arith.constant 1 : i32
    %c1_i32_11 = arith.constant 1 : i32
    %c0_i32_12 = arith.constant 0 : i32
    %8 = tpu.memref_slice %arg1[%c1_i32_11, %c0_i32_12] : memref<2x1024xf32, #tpu.memory_space<any>> -> memref<1x1024xf32, #tpu.memory_space<any>>
    %c1_i32_13 = arith.constant 1 : i32
    %c0_i32_14 = arith.constant 0 : i32
    %9 = tpu.memref_slice %arg3[%c1_i32_13, %c0_i32_14] : memref<2x2560xf32, #tpu.memory_space<any>> -> memref<1x1024xf32, #tpu.memory_space<any>>
    %10 = tpu.memref_slice %arg4[%c0_i32_9, %c1_i32_10] : memref<2x2x!tpu.dma_semaphore, #tpu.memory_space<semaphore_mem>> -> memref<1x1x!tpu.dma_semaphore, #tpu.memory_space<semaphore_mem>>
    %11 = tpu.memref_squeeze %10 : memref<1x1x!tpu.dma_semaphore, #tpu.memory_space<semaphore_mem>> -> memref<!tpu.dma_semaphore, #tpu.memory_space<semaphore_mem>>
    tpu.enqueue_dma source(%8 : memref<1x1024xf32, #tpu.memory_space<any>>) target(%9 : memref<1x1024xf32, #tpu.memory_space<any>>) target_semaphore(%11 : memref<!tpu.dma_semaphore, #tpu.memory_space<semaphore_mem>>)
    %c1_i32_15 = arith.constant 1 : i32
    %c1_i32_16 = arith.constant 1 : i32
    %c1_i32_17 = arith.constant 1 : i32
    %c0_i32_18 = arith.constant 0 : i32
    %12 = tpu.memref_slice %arg2[%c1_i32_17, %c0_i32_18] : memref<2x1536xf32, #tpu.memory_space<any>> -> memref<1x1536xf32, #tpu.memory_space<any>>
    %c1_i32_19 = arith.constant 1 : i32
    %c1024_i32_20 = arith.constant 1024 : i32
    %13 = tpu.memref_slice %arg3[%c1_i32_19, %c1024_i32_20] : memref<2x2560xf32, #tpu.memory_space<any>> -> memref<1x1536xf32, #tpu.memory_space<any>>
    %14 = tpu.memref_slice %arg4[%c1_i32_15, %c1_i32_16] : memref<2x2x!tpu.dma_semaphore, #tpu.memory_space<semaphore_mem>> -> memref<1x1x!tpu.dma_semaphore, #tpu.memory_space<semaphore_mem>>
    %15 = tpu.memref_squeeze %14 : memref<1x1x!tpu.dma_semaphore, #tpu.memory_space<semaphore_mem>> -> memref<!tpu.dma_semaphore, #tpu.memory_space<semaphore_mem>>
    tpu.enqueue_dma source(%12 : memref<1x1536xf32, #tpu.memory_space<any>>) target(%13 : memref<1x1536xf32, #tpu.memory_space<any>>) target_semaphore(%15 : memref<!tpu.dma_semaphore, #tpu.memory_space<semaphore_mem>>)
    %c0_i32_21 = arith.constant 0 : i32
    %c0_i32_22 = arith.constant 0 : i32
    %c0_i32_23 = arith.constant 0 : i32
    %c0_i32_24 = arith.constant 0 : i32
    %16 = tpu.memref_slice %arg1[%c0_i32_23, %c0_i32_24] : memref<2x1024xf32, #tpu.memory_space<any>> -> memref<1x1024xf32, #tpu.memory_space<any>>
    %c0_i32_25 = arith.constant 0 : i32
    %c0_i32_26 = arith.constant 0 : i32
    %17 = tpu.memref_slice %arg3[%c0_i32_25, %c0_i32_26] : memref<2x2560xf32, #tpu.memory_space<any>> -> memref<1x1024xf32, #tpu.memory_space<any>>
    %18 = tpu.memref_slice %arg4[%c0_i32_21, %c0_i32_22] : memref<2x2x!tpu.dma_semaphore, #tpu.memory_space<semaphore_mem>> -> memref<1x1x!tpu.dma_semaphore, #tpu.memory_space<semaphore_mem>>
    %19 = tpu.memref_squeeze %18 : memref<1x1x!tpu.dma_semaphore, #tpu.memory_space<semaphore_mem>> -> memref<!tpu.dma_semaphore, #tpu.memory_space<semaphore_mem>>
    tpu.wait_dma2 semaphore(%19 : memref<!tpu.dma_semaphore, #tpu.memory_space<semaphore_mem>>) src(%16 : memref<1x1024xf32, #tpu.memory_space<any>>) dst(%17 : memref<1x1024xf32, #tpu.memory_space<any>>)
    %c1_i32_27 = arith.constant 1 : i32
    %c0_i32_28 = arith.constant 0 : i32
    %c0_i32_29 = arith.constant 0 : i32
    %c0_i32_30 = arith.constant 0 : i32
    %20 = tpu.memref_slice %arg2[%c0_i32_29, %c0_i32_30] : memref<2x1536xf32, #tpu.memory_space<any>> -> memref<1x1536xf32, #tpu.memory_space<any>>
    %c0_i32_31 = arith.constant 0 : i32
    %c1024_i32_32 = arith.constant 1024 : i32
    %21 = tpu.memref_slice %arg3[%c0_i32_31, %c1024_i32_32] : memref<2x2560xf32, #tpu.memory_space<any>> -> memref<1x1536xf32, #tpu.memory_space<any>>
    %22 = tpu.memref_slice %arg4[%c1_i32_27, %c0_i32_28] : memref<2x2x!tpu.dma_semaphore, #tpu.memory_space<semaphore_mem>> -> memref<1x1x!tpu.dma_semaphore, #tpu.memory_space<semaphore_mem>>
    %23 = tpu.memref_squeeze %22 : memref<1x1x!tpu.dma_semaphore, #tpu.memory_space<semaphore_mem>> -> memref<!tpu.dma_semaphore, #tpu.memory_space<semaphore_mem>>
    tpu.wait_dma2 semaphore(%23 : memref<!tpu.dma_semaphore, #tpu.memory_space<semaphore_mem>>) src(%20 : memref<1x1536xf32, #tpu.memory_space<any>>) dst(%21 : memref<1x1536xf32, #tpu.memory_space<any>>)
    %c0_i32_33 = arith.constant 0 : i32
    %c1_i32_34 = arith.constant 1 : i32
    %c1_i32_35 = arith.constant 1 : i32
    %c0_i32_36 = arith.constant 0 : i32
    %24 = tpu.memref_slice %arg1[%c1_i32_35, %c0_i32_36] : memref<2x1024xf32, #tpu.memory_space<any>> -> memref<1x1024xf32, #tpu.memory_space<any>>
    %c1_i32_37 = arith.constant 1 : i32
    %c0_i32_38 = arith.constant 0 : i32
    %25 = tpu.memref_slice %arg3[%c1_i32_37, %c0_i32_38] : memref<2x2560xf32, #tpu.memory_space<any>> -> memref<1x1024xf32, #tpu.memory_space<any>>
    %26 = tpu.memref_slice %arg4[%c0_i32_33, %c1_i32_34] : memref<2x2x!tpu.dma_semaphore, #tpu.memory_space<semaphore_mem>> -> memref<1x1x!tpu.dma_semaphore, #tpu.memory_space<semaphore_mem>>
    %27 = tpu.memref_squeeze %26 : memref<1x1x!tpu.dma_semaphore, #tpu.memory_space<semaphore_mem>> -> memref<!tpu.dma_semaphore, #tpu.memory_space<semaphore_mem>>
    tpu.wait_dma2 semaphore(%27 : memref<!tpu.dma_semaphore, #tpu.memory_space<semaphore_mem>>) src(%24 : memref<1x1024xf32, #tpu.memory_space<any>>) dst(%25 : memref<1x1024xf32, #tpu.memory_space<any>>)
    %c1_i32_39 = arith.constant 1 : i32
    %c1_i32_40 = arith.constant 1 : i32
    %c1_i32_41 = arith.constant 1 : i32
    %c0_i32_42 = arith.constant 0 : i32
    %28 = tpu.memref_slice %arg2[%c1_i32_41, %c0_i32_42] : memref<2x1536xf32, #tpu.memory_space<any>> -> memref<1x1536xf32, #tpu.memory_space<any>>
    %c1_i32_43 = arith.constant 1 : i32
    %c1024_i32_44 = arith.constant 1024 : i32
    %29 = tpu.memref_slice %arg3[%c1_i32_43, %c1024_i32_44] : memref<2x2560xf32, #tpu.memory_space<any>> -> memref<1x1536xf32, #tpu.memory_space<any>>
    %30 = tpu.memref_slice %arg4[%c1_i32_39, %c1_i32_40] : memref<2x2x!tpu.dma_semaphore, #tpu.memory_space<semaphore_mem>> -> memref<1x1x!tpu.dma_semaphore, #tpu.memory_space<semaphore_mem>>
    %31 = tpu.memref_squeeze %30 : memref<1x1x!tpu.dma_semaphore, #tpu.memory_space<semaphore_mem>> -> memref<!tpu.dma_semaphore, #tpu.memory_space<semaphore_mem>>
    tpu.wait_dma2 semaphore(%31 : memref<!tpu.dma_semaphore, #tpu.memory_space<semaphore_mem>>) src(%28 : memref<1x1536xf32, #tpu.memory_space<any>>) dst(%29 : memref<1x1536xf32, #tpu.memory_space<any>>)
    return
  }
}

</mosaic_0001>

<llo_original>
// kernel: tpu_custom_call.1
$region0: #{tpu_custom_call.1}
  #allocation0 [shape = 'u32[]', space=smem, size = 0x4, offset = 0x4, fixed_abs, tag = 'smem constant byte address 0x4 - core index']
  #allocation1 [shape = 'u32[144,128]{1,0:T(1,128)}', space=vmem, size = 0x12000, scoped, tag = 'internal scratch']
  #allocation2 [shape = 's32[4]{0}', space=sflag, size = 0x10, scoped, tag = 'scratch operand']
  #allocation3 [shape = 's32[]', space=sflag, size = 0x4, offset = 0, fixed_abs, tag = 'sflag constant byte address 0x0 - dummy sync flag']
  #allocation5 [shape = 's32[]', space=sflag, size = 0x4, offset = 0, fixed_abs, tag = 'sflag constant byte address 0x0 - dummy sync flag']
  #allocation7 [shape = 's32[]', space=sflag, size = 0x4, offset = 0, fixed_abs, tag = 'sflag constant byte address 0x0 - dummy sync flag']
  #allocation9 [shape = 's32[]', space=sflag, size = 0x4, offset = 0, fixed_abs, tag = 'sflag constant byte address 0x0 - dummy sync flag']
  %s0 = inlined_call_operand.hbm [shape: f32[2,1024], index: 0, kind: input, shape index: {}]
  %s1 = inlined_call_operand.hbm [shape: f32[2,1536], index: 1, kind: input, shape index: {}]
  %s2 = inlined_call_operand.hbm [shape: f32[2,2560], index: 2, kind: output, shape index: {}]
  %s3 = sld [smem:[#allocation0]]
  $region2: #{tpu_custom_call.1} parent=0
    _
  %s5 = ssub.s32 1, %s3
  %s6 = scalar_select 0, %s5, %s3
  $region1: #{tpu_custom_call.1} parent=0
    #allocation4 [shape = 'u32[3]{0}', space=smem, size = 0xc, scoped, tag = 'DMA stride descriptor']
    #allocation6 [shape = 'u32[3]{0}', space=smem, size = 0xc, scoped, tag = 'DMA stride descriptor']
    #allocation8 [shape = 'u32[3]{0}', space=smem, size = 0xc, scoped, tag = 'DMA stride descriptor']
    #allocation10 [shape = 'u32[3]{0}', space=smem, size = 0xc, scoped, tag = 'DMA stride descriptor']
    %s8 = sshll.u32 1, 14
    %s9 = sxor.u32 4294967295, %s8
    %13 = sst [smem:[#allocation4]] 32
    %s14 = scalar_lea.smem [#allocation4], 1
    %15 = sst [smem:[%s14]] 32
    %s16 = scalar_lea.smem [#allocation4], 2
    %17 = sst [smem:[%s16]] 1
    %19 = dma.general %s0, 128, %s2, [#allocation2], 131072, [#allocation4], 0, 0
    %s20 = scalar_lea.hbm %s2, 256
    %s21 = scalar_lea.sflag [#allocation2], 2
    %s23 = sshll.u32 1, 14
    %s24 = sxor.u32 4294967295, %s23
    %28 = sst [smem:[#allocation6]] 32
    %s29 = scalar_lea.smem [#allocation6], 1
    %30 = sst [smem:[%s29]] 32
    %s31 = scalar_lea.smem [#allocation6], 2
    %32 = sst [smem:[%s31]] 1
    %34 = dma.general %s1, 192, %s20, %s21, 131072, [#allocation6], 0, 0
    %s35 = scalar_lea.hbm %s0, 16
    %s36 = scalar_lea.hbm %s2, 16
    %s37 = scalar_lea.sflag [#allocation2], 1
    %s39 = sshll.u32 1, 14
    %s40 = sxor.u32 4294967295, %s39
    %44 = sst [smem:[#allocation8]] 32
    %s45 = scalar_lea.smem [#allocation8], 1
    %46 = sst [smem:[%s45]] 32
    %s47 = scalar_lea.smem [#allocation8], 2
    %48 = sst [smem:[%s47]] 1
    %50 = dma.general %s35, 128, %s36, %s37, 131072, [#allocation8], 0, 0
    %s51 = scalar_lea.hbm %s1, 16
    %s52 = scalar_lea.hbm %s2, 272
    %s53 = scalar_lea.sflag [#allocation2], 3
    %s55 = sshll.u32 1, 14
    %s56 = sxor.u32 4294967295, %s55
    %60 = sst [smem:[#allocation10]] 32
    %s61 = scalar_lea.smem [#allocation10], 1
    %62 = sst [smem:[%s61]] 32
    %s63 = scalar_lea.smem [#allocation10], 2
    %64 = sst [smem:[%s63]] 1
    %66 = dma.general %s51, 192, %s52, %s53, 131072, [#allocation10], 0, 0
    %s67 = smul.u32 1, 8
    %s68 = sshll.u32 %s67, 4
    %69 = dma.done [#allocation2], %s68
    %s70 = smul.u32 1, 12
    %s71 = sshll.u32 %s70, 4
    %72 = dma.done %s21, %s71
    %s73 = sshll.u32 %s67, 4
    %74 = dma.done %s37, %s73
    %s75 = sshll.u32 %s70, 4
    %76 = dma.done %s53, %s75
  %77 = vsyncmov [#allocation2]
  %s78 = vpop.sfrf %77
  %p79 = scmp.eq.s32.totalorder %s78, 0
  %p80 = pneg %p79
  %82 = shalt.err (%p80)
  %s83 = scalar_lea.sflag [#allocation2], 1
  %84 = vsyncmov %s83
  %s85 = vpop.sfrf %84
  %p86 = scmp.eq.s32.totalorder %s85, 0
  %p87 = pneg %p86
  %89 = shalt.err (%p87)
  %s90 = scalar_lea.sflag [#allocation2], 2
  %91 = vsyncmov %s90
  %s92 = vpop.sfrf %91
  %p93 = scmp.eq.s32.totalorder %s92, 0
  %p94 = pneg %p93
  %96 = shalt.err (%p94)
  %s97 = scalar_lea.sflag [#allocation2], 3
  %98 = vsyncmov %s97
  %s99 = vpop.sfrf %98
  %p100 = scmp.eq.s32.totalorder %s99, 0
  %p101 = pneg %p100
  %103 = shalt.err (%p101)

</llo_original>
